<compile_context>
chip_gen: v5e
topology: v5e:2x2
jax: 0.10.0
libtpu: 0.0.40
codegen_flags: <defaults>
</compile_context>

<pallas_src>
import functools

import jax
import jax.numpy as jnp
from jax.experimental import pallas as pl
from jax.experimental.pallas import tpu as pltpu


def _norm_kernel(x_ref, alpha_ref, bias_ref, o_ref, *, d_model, eps):
    # x_ref: (tile_rows, d_model); alpha/bias: (1, d_model) f32, VMEM-resident.
    x = x_ref[...].astype(jnp.float32)
    mean = jnp.mean(x, axis=-1, keepdims=True)                      # (tile, 1)
    xc = x - mean                                                   # x dead after this
    # torch.std default is the UNBIASED estimator (ddof=1); eps is added to
    # std (NOT to var) to match the module exactly.
    var = jnp.sum(xc * xc, axis=-1, keepdims=True) / (d_model - 1)  # (tile, 1)
    y = jnp.sqrt(var) + eps
    # EUP approx reciprocal + one Newton-Raphson step: ~2^-24 rel. error on a
    # (tile, 1) column, keeps the divide off the VPU slots.
    r = pl.reciprocal(y, approx=True)
    inv = r * (2.0 - y * r)
    o_ref[...] = (xc * inv * alpha_ref[...] + bias_ref[...]).astype(o_ref.dtype)


def _vmem_limit_bytes():
    """Scoped VMEM limit for the pallas_call, derived from the chip when possible."""
    cap = None
    try:
        cap = pltpu.get_tpu_info().vmem_capacity_bytes
    except Exception:
        cap = None
    if not cap:
        cap = 64 * 1024 * 1024  # conservative fallback (v7x per-TC physical VMEM)
    # 3/4 of physical leaves headroom for compiler scratch:
    #   128 MiB parts (v5e/v6e) -> 96 MiB, 64 MiB parts (v7x) -> 48 MiB.
    return int(min(96 * 1024 * 1024, (cap * 3) // 4))


def _pick_tile_rows(rows, d_model, in_itemsize, out_itemsize, vmem_limit, min_steps=4):
    """Largest row tile whose full VMEM bill fits the budget, keeping >= min_steps grid steps."""
    # Full sublane packing of the streamed (input) dtype: 8 rows f32, 16 bf16, 32 int8.
    sub = 8 * max(1, 4 // max(1, in_itemsize))
    rows_up = -(-rows // sub) * sub

    # Per-row VMEM bill: double-buffered input + output streams at their native
    # itemsize, plus ~3 live (tile, d_model) f32 intermediates in the body.
    per_row_bytes = d_model * (2 * in_itemsize + 2 * out_itemsize + 3 * 4)
    budget = int(vmem_limit * 0.8)  # leave slack under the scoped limit
    tile = max(sub, (budget // per_row_bytes) // sub * sub)

    # Keep >= min_steps grid steps so the double-buffered pipeline and v7x's
    # second TensorCore ("parallel" row axis) have work to overlap/shard.
    steps_cap = -(-rows_up // min_steps)
    steps_cap = max(sub, -(-steps_cap // sub) * sub)
    tile = min(tile, steps_cap)

    # Never make the block larger than the (sublane-aligned) row count.
    return min(tile, rows_up)


def norm_forward(x, alpha, bias, eps=1e-6):
    """Pallas implementation of Norm.forward. x: (..., d_model)."""
    d_model = x.shape[-1]
    assert d_model > 1, "d_model must be > 1 (unbiased std uses ddof=1)"
    orig_shape = x.shape
    x2 = x.reshape(-1, d_model)
    rows = x2.shape[0]

    in_itemsize = x2.dtype.itemsize
    out_itemsize = in_itemsize  # output dtype == input dtype
    vmem_limit = _vmem_limit_bytes()
    tile_rows = _pick_tile_rows(rows, d_model, in_itemsize, out_itemsize, vmem_limit)
    grid = (pl.cdiv(rows, tile_rows),)  # ragged last block handled by Pallas

    # Hoist parameter casts out of the per-step kernel body.
    alpha2 = alpha.reshape(1, d_model).astype(jnp.float32)
    bias2 = bias.reshape(1, d_model).astype(jnp.float32)

    kernel = functools.partial(_norm_kernel, d_model=d_model, eps=eps)

    # Advisory cost so XLA overlaps neighbors around this HBM-bound call.
    cost = pl.CostEstimate(
        flops=7 * rows * d_model,
        transcendentals=2 * rows,  # sqrt + reciprocal per row
        bytes_accessed=rows * d_model * (in_itemsize + out_itemsize) + 2 * d_model * 4,
    )

    # TODO(synk): for d_model < 128 the output stores are lane-masked; folding
    # rows into the lane axis (lane-dense out_spec) would help narrow models
    # but complicates the per-row reduction — not needed for typical widths.
    out = pl.pallas_call(
        kernel,
        out_shape=jax.ShapeDtypeStruct((rows, d_model), x.dtype),
        grid_spec=pltpu.PrefetchScalarGridSpec(
            num_scalar_prefetch=0,
            grid=grid,
            in_specs=[
                pl.BlockSpec((tile_rows, d_model), lambda i: (i, 0)),
                pl.BlockSpec((1, d_model), lambda i: (0, 0)),
                pl.BlockSpec((1, d_model), lambda i: (0, 0)),
            ],
            out_specs=pl.BlockSpec((tile_rows, d_model), lambda i: (i, 0)),
        ),
        compiler_params=pltpu.CompilerParams(
            dimension_semantics=("parallel",),   # shards rows across TCs on v7x
            vmem_limit_bytes=vmem_limit,         # 48 MiB on v7x, 96 MiB on v5e/v6e
        ),
        cost_estimate=cost,
    )(x2, alpha2, bias2)

    return out.reshape(orig_shape)


def _reference(x, alpha, bias, eps=1e-6):
    x32 = x.astype(jnp.float32)
    mean = jnp.mean(x32, axis=-1, keepdims=True)
    xc = x32 - mean
    var = jnp.sum(xc * xc, axis=-1, keepdims=True) / (x.shape[-1] - 1)
    std = jnp.sqrt(var)
    return (alpha * xc / (std + eps) + bias).astype(x.dtype)


if __name__ == "__main__":
    key = jax.random.PRNGKey(0)
    batch, seq, d_model = 2, 8, 32

    x = jax.random.normal(key, (batch, seq, d_model), dtype=jnp.float32)
    # Parameters initialized exactly as in the module's __init__:
    alpha = jnp.ones((d_model,), dtype=jnp.float32)
    bias = jnp.zeros((d_model,), dtype=jnp.float32)

    out = norm_forward(x, alpha, bias, eps=1e-6)
    out = jax.block_until_ready(out)

    ref = _reference(x, alpha, bias, eps=1e-6)
    assert out.shape == x.shape
    assert jnp.allclose(out, ref, atol=1e-5, rtol=1e-5)
    print("KERNEL_OK")
</pallas_src>

<mosaic_0001>
module attributes {stable_mosaic.version = 11 : i64} {
  func.func @_norm_kernel(%arg0: i32, %arg1: memref<8x32xf32, #tpu.memory_space<vmem>>, %arg2: memref<1x32xf32, #tpu.memory_space<vmem>>, %arg3: memref<1x32xf32, #tpu.memory_space<vmem>>, %arg4: memref<8x32xf32, #tpu.memory_space<vmem>>) attributes {dimension_semantics = [#tpu.dimension_semantics<parallel>], iteration_bounds = array<i64: 2>, scalar_prefetch = 0 : i64, scratch_operands = 0 : i64, tpu.core_type = #tpu.core_type<tc>, window_params = [{transform_indices = @transform_0, window_bounds = array<i64: 8, 32>}, {pipeline_mode = #tpu.pipeline_mode<synchronous>, transform_indices = @transform_1, window_bounds = array<i64: 1, 32>}, {pipeline_mode = #tpu.pipeline_mode<synchronous>, transform_indices = @transform_2, window_bounds = array<i64: 1, 32>}, {transform_indices = @transform_3, window_bounds = array<i64: 8, 32>}]} {
    %c0 = arith.constant 0 : index
    %c0_0 = arith.constant 0 : index
    %0 = vector.load %arg1[%c0, %c0_0] : memref<8x32xf32, #tpu.memory_space<vmem>>, vector<8x32xf32>
    %cst = arith.constant dense<0.000000e+00> : vector<8xf32>
    %1 = vector.multi_reduction <add>, %0, %cst [1] : vector<8x32xf32> to vector<8xf32>
    %2 = vector.shape_cast %1 : vector<8xf32> to vector<8x1xf32>
    %cst_1 = arith.constant 3.200000e+01 : f32
    %3 = vector.broadcast %cst_1 : f32 to vector<8x1xf32>
    %4 = arith.divf %2, %3 : vector<8x1xf32>
    %5 = vector.broadcast %4 : vector<8x1xf32> to vector<8x32xf32>
    %6 = arith.subf %0, %5 : vector<8x32xf32>
    %7 = arith.mulf %6, %6 : vector<8x32xf32>
    %cst_2 = arith.constant dense<0.000000e+00> : vector<8xf32>
    %8 = vector.multi_reduction <add>, %7, %cst_2 [1] : vector<8x32xf32> to vector<8xf32>
    %9 = vector.shape_cast %8 : vector<8xf32> to vector<8x1xf32>
    %cst_3 = arith.constant 3.100000e+01 : f32
    %10 = vector.broadcast %cst_3 : f32 to vector<8x1xf32>
    %11 = arith.divf %9, %10 : vector<8x1xf32>
    %12 = math.sqrt %11 : vector<8x1xf32>
    %cst_4 = arith.constant 9.99999997E-7 : f32
    %13 = vector.broadcast %cst_4 : f32 to vector<8x1xf32>
    %14 = arith.addf %12, %13 : vector<8x1xf32>
    %15 = tpu.reciprocal %14 {approx = true} : vector<8x1xf32> -> vector<8x1xf32>
    %16 = arith.mulf %14, %15 : vector<8x1xf32>
    %cst_5 = arith.constant 2.000000e+00 : f32
    %17 = vector.broadcast %cst_5 : f32 to vector<8x1xf32>
    %18 = arith.subf %17, %16 : vector<8x1xf32>
    %19 = arith.mulf %15, %18 : vector<8x1xf32>
    %20 = vector.broadcast %19 : vector<8x1xf32> to vector<8x32xf32>
    %21 = arith.mulf %6, %20 : vector<8x32xf32>
    %c0_6 = arith.constant 0 : index
    %c0_7 = arith.constant 0 : index
    %22 = vector.load %arg2[%c0_6, %c0_7] : memref<1x32xf32, #tpu.memory_space<vmem>>, vector<1x32xf32>
    %23 = vector.broadcast %22 : vector<1x32xf32> to vector<8x32xf32>
    %24 = arith.mulf %21, %23 : vector<8x32xf32>
    %c0_8 = arith.constant 0 : index
    %c0_9 = arith.constant 0 : index
    %25 = vector.load %arg3[%c0_8, %c0_9] : memref<1x32xf32, #tpu.memory_space<vmem>>, vector<1x32xf32>
    %26 = vector.broadcast %25 : vector<1x32xf32> to vector<8x32xf32>
    %27 = arith.addf %24, %26 : vector<8x32xf32>
    %c0_10 = arith.constant 0 : index
    %c0_11 = arith.constant 0 : index
    %28 = vector.load %arg4[%c0_10, %c0_11] : memref<8x32xf32, #tpu.memory_space<vmem>>, vector<8x32xf32>
    tpu.vector_store %arg4[%c0_10, %c0_11], %27 {strides = array<i32>} : memref<8x32xf32, #tpu.memory_space<vmem>>, vector<8x32xf32>,
    return
  }
  func.func @transform_0(%arg0: i32) -> (i32, i32) {
    %c0_i32 = arith.constant 0 : i32
    %c0_i32_0 = arith.constant 0 : i32
    return %arg0, %c0_i32 : i32, i32
  }
  func.func @transform_1(%arg0: i32) -> (i32, i32) {
    %c0_i32 = arith.constant 0 : i32
    %c0_i32_0 = arith.constant 0 : i32
    %c0_i32_1 = arith.constant 0 : i32
    return %c0_i32, %c0_i32_0 : i32, i32
  }
  func.func @transform_2(%arg0: i32) -> (i32, i32) {
    %c0_i32 = arith.constant 0 : i32
    %c0_i32_0 = arith.constant 0 : i32
    %c0_i32_1 = arith.constant 0 : i32
    return %c0_i32, %c0_i32_0 : i32, i32
  }
  func.func @transform_3(%arg0: i32) -> (i32, i32) {
    %c0_i32 = arith.constant 0 : i32
    %c0_i32_0 = arith.constant 0 : i32
    return %arg0, %c0_i32 : i32, i32
  }
}

</mosaic_0001>

<llo_original>
// kernel: tpu_custom_call.1
$region0: #{tpu_custom_call.1}
  #allocation0 [shape = 'u32[]', space=smem, size = 0x4, offset = 0x4, fixed_abs, tag = 'smem constant byte address 0x4 - core index']
  #allocation1 [shape = 'u32[72,128]{1,0:T(1,128)}', space=vmem, size = 0x9000, scoped, tag = 'internal scratch']
  %s0 = inlined_call_operand.hbm [shape: f32[16,32], index: 0, kind: input, shape index: {}]
  %s1 = inlined_call_operand.hbm [shape: f32[1,32], index: 1, kind: input, shape index: {}]
  %s2 = inlined_call_operand.vmem [shape: f32[1,32], index: 2, kind: input, shape index: {}]
  %s3 = inlined_call_operand.hbm [shape: f32[16,32], index: 3, kind: output, shape index: {}]
  %s4 = sld [smem:[#allocation0]]
  $region53: #{tpu_custom_call.1} parent=0
    _
  %s6 = ssub.s32 1, %s4
  %s7 = scalar_select 0, %s6, %s4
  $region1: #{tpu_custom_call.1} parent=0
    #allocation2 [shape = 'u8[8192]{0}', space=vmem, size = 0x2000, scoped, tag = 'input window, operand 0']
    #allocation3 [shape = 's32[2]{0}', space=sflag, size = 0x8, scoped, tag = 'scoped memory for tpu_custom_call.1']
    #allocation4 [shape = 's32[2]{0}', space=sflag, size = 0x8, scoped, tag = 'scoped memory for tpu_custom_call.1']
    #allocation5 [shape = 'u8[512]{0}', space=vmem, size = 0x400, scoped, tag = 'input window, operand 1, single buffered']
    #allocation6 [shape = 's32[1]{0}', space=sflag, size = 0x4, scoped, tag = 'scoped memory for tpu_custom_call.1']
    #allocation7 [shape = 'u8[8192]{0}', space=vmem, size = 0x2000, scoped, tag = 'output window, operand 0']
    %8 = vsyncpa [#allocation3], 0
    %s9 = scalar_lea.sflag [#allocation3], 1
    %10 = vsyncpa %s9, 0
    %11 = vsyncpa [#allocation6], 0
    %12 = vsyncpa [#allocation4], 0
    %s13 = scalar_lea.sflag [#allocation4], 1
    %14 = vsyncpa %s13, 0
    loop: start=0, step=1, limit=4
    $region2: #{tpu_custom_call.1} parent=1 // loop_pre_header
      _
    $region3: #{tpu_custom_call.1} parent=1 // loop_header
      %s16 = sphi 0, %s20
      %p17 = scmp.ge.s32.totalorder %s16, 4
      %s26 = sphi 0, %s28
      %s29 = sphi 0, %s26
      %s30 = sphi 0, %s29
      %s46 = sphi 0, %s30
      %s50 = sphi 0, %s50
      %s52 = sphi 0, %s50
      %s53 = sphi 0, %s52
      %s67 = sphi 0, %s53
      %s71 = sphi 0, %s71
      %s73 = sphi 0, %s71
      %s74 = sphi 0, %s73
      %s88 = sphi 0, %s74
      %s94 = sphi 0, %s96
      %s97 = sphi 0, %s94
      %s98 = sphi 0, %s97
      %s114 = sphi 0, %s98
    $region4: #{tpu_custom_call.1} parent=1 // loop_header_branch
      %19 = sbr.rel (%p17) target = $region8
    $region5: #{tpu_custom_call.1} parent=1 // loop_body
      %s21 = ssub.s32 %s16, 1
      %s22 = ssub.s32 %s16, 2
      %s23 = sadd.s32 %s16, 1
      %s24 = ssub.s32 %s16, %s23
      %p25 = scmp.eq.s32.totalorder %s24, 0
      %s27 = sadd.s32 %s26, 1
      %s28 = scalar_select %p25, %s26, %s27
      %p31 = pneg %p25
      %p32 = scmp.eq.s32.totalorder %s16, 1
      %p33 = por %p31, %p32
      %p34 = scmp.ne.s32.totalorder %s26, %s29
      %p35 = scmp.eq.s32.totalorder %s16, 0
      %p36 = por %p34, %p35
      %p37 = scmp.ne.s32.totalorder %s26, %s29
      %p38 = scmp.eq.s32.totalorder %s21, 1
      %p39 = por %p37, %p38
      %p40 = scmp.ne.s32.totalorder %s29, %s30
      %p41 = scmp.eq.s32.totalorder %s21, 0
      %p42 = por %p40, %p41
      %p43 = scmp.ne.s32.totalorder %s29, %s30
      %p44 = scmp.eq.s32.totalorder %s22, 1
      %p45 = por %p43, %p44
      %p47 = scmp.ne.s32.totalorder %s30, %s46
      %p48 = scmp.eq.s32.totalorder %s22, 0
      %p49 = por %p47, %p48
      %s51 = sadd.s32 %s50, 1
      %p54 = scmp.eq.s32.totalorder %s16, 1
      %p55 = scmp.ne.s32.totalorder %s50, %s52
      %p56 = scmp.eq.s32.totalorder %s16, 0
      %p57 = por %p55, %p56
      %p58 = scmp.ne.s32.totalorder %s50, %s52
      %p59 = scmp.eq.s32.totalorder %s21, 1
      %p60 = por %p58, %p59
      %p61 = scmp.ne.s32.totalorder %s52, %s53
      %p62 = scmp.eq.s32.totalorder %s21, 0
      %p63 = por %p61, %p62
      %p64 = scmp.ne.s32.totalorder %s52, %s53
      %p65 = scmp.eq.s32.totalorder %s22, 1
      %p66 = por %p64, %p65
      %p68 = scmp.ne.s32.totalorder %s53, %s67
      %p69 = scmp.eq.s32.totalorder %s22, 0
      %p70 = por %p68, %p69
      %s72 = sadd.s32 %s71, 1
      %p75 = scmp.eq.s32.totalorder %s16, 1
      %p76 = scmp.ne.s32.totalorder %s71, %s73
      %p77 = scmp.eq.s32.totalorder %s16, 0
      %p78 = por %p76, %p77
      %p79 = scmp.ne.s32.totalorder %s71, %s73
      %p80 = scmp.eq.s32.totalorder %s21, 1
      %p81 = por %p79, %p80
      %p82 = scmp.ne.s32.totalorder %s73, %s74
      %p83 = scmp.eq.s32.totalorder %s21, 0
      %p84 = por %p82, %p83
      %p85 = scmp.ne.s32.totalorder %s73, %s74
      %p86 = scmp.eq.s32.totalorder %s22, 1
      %p87 = por %p85, %p86
      %p89 = scmp.ne.s32.totalorder %s74, %s88
      %p90 = scmp.eq.s32.totalorder %s22, 0
      %p91 = por %p89, %p90
      %s92 = ssub.s32 %s16, %s23
      %p93 = scmp.eq.s32.totalorder %s92, 0
      %s95 = sadd.s32 %s94, 1
      %s96 = scalar_select %p93, %s94, %s95
      %p99 = pneg %p93
      %p100 = scmp.eq.s32.totalorder %s16, 1
      %p101 = por %p99, %p100
      %p102 = scmp.ne.s32.totalorder %s94, %s97
      %p103 = scmp.eq.s32.totalorder %s16, 0
      %p104 = por %p102, %p103
      %p105 = scmp.ne.s32.totalorder %s94, %s97
      %p106 = scmp.eq.s32.totalorder %s21, 1
      %p107 = por %p105, %p106
      %p108 = scmp.ne.s32.totalorder %s97, %s98
      %p109 = scmp.eq.s32.totalorder %s21, 0
      %p110 = por %p108, %p109
      %p111 = scmp.ne.s32.totalorder %s97, %s98
      %p112 = scmp.eq.s32.totalorder %s22, 1
      %p113 = por %p111, %p112
      %p115 = scmp.ne.s32.totalorder %s98, %s114
      %p116 = scmp.eq.s32.totalorder %s22, 0
      %p117 = por %p115, %p116
      %p118 = scmp.le.s32.totalorder 1, %s16
      %p119 = scmp.lt.s32.totalorder %s16, 3
      %p120 = pnand %p118, %p119
      %p121 = pneg %p120
      // Predicated region
      $region9: #{tpu_custom_call.1} parent=5 // pred_check
        _
      $region10: #{tpu_custom_call.1} parent=5 // pred_check_branch
        %123 = sbr.rel (%p120) target = $region12
      $region11: #{tpu_custom_call.1} parent=5 // pred_region
        %s124 = ssub.s32 %s16, 1
        // Predicated region
        $region13: #{tpu_custom_call.1} parent=11 // pred_check
          %p125 = pneg %p63
        $region14: #{tpu_custom_call.1} parent=11 // pred_check_branch
          %127 = sbr.rel (%p125) target = $region16
        $region15: #{tpu_custom_call.1} parent=11 // pred_region
          %129 = vsyncadd [#allocation6], 0
          %s131 = sshll.u32 %s1, 4
          %s132 = int_to_ptr.hbm [resolvable:$true] %s131
          %s133 = sshll.u32 [#allocation5], 4
          %s134 = int_to_ptr.vmem [resolvable:$true] %s133
          %136 = dma.hbm_to_vmem [thread:$0]  %s132, 16, %s134, [#allocation6]
        $region16: #{tpu_custom_call.1} parent=11 // pred_fallthru
          _
        // Predicated region
        $region17: #{tpu_custom_call.1} parent=11 // pred_check
          %p137 = pneg %p84
        $region18: #{tpu_custom_call.1} parent=11 // pred_check_branch
          %139 = sbr.rel (%p137) target = $region20
        $region19: #{tpu_custom_call.1} parent=11 // pred_region
          _
        $region20: #{tpu_custom_call.1} parent=11 // pred_fallthru
          _
      $region12: #{tpu_custom_call.1} parent=5 // pred_fallthru
        _
      %p140 = scmp.lt.s32.totalorder %s16, 2
      // Predicated region
      $region21: #{tpu_custom_call.1} parent=5 // pred_check
        %p141 = pneg %p140
      $region22: #{tpu_custom_call.1} parent=5 // pred_check_branch
        %143 = sbr.rel (%p141) target = $region24
      $region23: #{tpu_custom_call.1} parent=5 // pred_region
        // Predicated region
        $region25: #{tpu_custom_call.1} parent=23 // pred_check
          %p144 = pneg %p36
        $region26: #{tpu_custom_call.1} parent=23 // pred_check_branch
          %146 = sbr.rel (%p144) target = $region28
        $region27: #{tpu_custom_call.1} parent=23 // pred_region
          %s147 = sand.u32 %s26, 1
          %s148 = scalar_lea.sflag [#allocation3], %s147
          %s149 = sand.u32 %s26, 1
          %s150 = smul.addr %s149, 8
          %s151 = scalar_lea.vmem [#allocation2], %s150
          %153 = vsyncadd %s148, 0
          %s154 = smul.addr %s16, 8
          %s155 = scalar_lea.hbm %s0, %s154
          %s157 = sshll.u32 %s155, 4
          %s158 = int_to_ptr.hbm [resolvable:$true] %s157
          %s159 = sshll.u32 %s151, 4
          %s160 = int_to_ptr.vmem [resolvable:$true] %s159
          %162 = dma.hbm_to_vmem [thread:$0]  %s158, 128, %s160, %s148
        $region28: #{tpu_custom_call.1} parent=23 // pred_fallthru
          _
      $region24: #{tpu_custom_call.1} parent=5 // pred_fallthru
        _
      %p163 = scmp.le.s32.totalorder 1, %s16
      %p164 = scmp.lt.s32.totalorder %s16, 3
      %p165 = pnand %p163, %p164
      %p166 = pneg %p165
      // Predicated region
      $region29: #{tpu_custom_call.1} parent=5 // pred_check
        _
      $region30: #{tpu_custom_call.1} parent=5 // pred_check_branch
        %168 = sbr.rel (%p165) target = $region32
      $region31: #{tpu_custom_call.1} parent=5 // pred_region
        %s169 = ssub.s32 %s16, 1
        %s170 = sand.u32 %s29, 1
        %s171 = scalar_lea.sflag [#allocation3], %s170
        %s172 = sand.u32 %s29, 1
        %s173 = smul.addr %s172, 8
        %s174 = scalar_lea.vmem [#allocation2], %s173
        // Predicated region
        $region33: #{tpu_custom_call.1} parent=31 // pred_check
          %p175 = pneg %p42
        $region34: #{tpu_custom_call.1} parent=31 // pred_check_branch
          %177 = sbr.rel (%p175) target = $region36
        $region35: #{tpu_custom_call.1} parent=31 // pred_region
          %179 = dma.done %s171, 128
        $region36: #{tpu_custom_call.1} parent=31 // pred_fallthru
          _
        // Predicated region
        $region37: #{tpu_custom_call.1} parent=31 // pred_check
          %p180 = pneg %p63
        $region38: #{tpu_custom_call.1} parent=31 // pred_check_branch
          %182 = sbr.rel (%p180) target = $region40
        $region39: #{tpu_custom_call.1} parent=31 // pred_region
          %184 = dma.done [#allocation6], 16
        $region40: #{tpu_custom_call.1} parent=31 // pred_fallthru
          _
        %s185 = sand.u32 %s29, 1
        %s186 = scalar_lea.sflag [#allocation3], %s185
        %s187 = sand.u32 %s29, 1
        %s188 = smul.addr %s187, 8
        %s189 = scalar_lea.vmem [#allocation2], %s188
        %p190 = pneg %p42
        %p191 = pneg %p39
        %p192 = pneg %p63
        %p193 = pneg %p60
        %p194 = pneg %p84
        %p195 = pneg %p81
        %p196 = pneg %p110
        %p197 = pneg %p107
        %s198 = sand.u32 %s97, 1
        %s199 = scalar_lea.sflag [#allocation4], %s198
        %s200 = sand.u32 %s97, 1
        %s201 = smul.addr %s200, 8
        %s202 = scalar_lea.vmem [#allocation7], %s201
        %v203 = vld [vmem:[%s174] sm:$0xff]
        %vm204 = vcmask 261120
        %v205 = vsel %vm204, %v203, 0.0
        %206 = vadd.xlane.f32.xlu0 %v205
        %v207 = vpop.xlane.xlu0 %206
        %v208 = vrcp.pop 32.0
        %v209 = vmul.f32 32.0, %v208
        %v210 = vsub.f32 1.0, %v209
        %v211 = vmul.f32 %v208, %v210
        %v212 = vadd.f32 %v208, %v211
        %vm213 = vweird.f32 %v208
        %v214 = vsel %vm213, %v208, %v212
        %v215 = vmul.f32 %v207, %v214
        %v216 = vsub.f32 %v203, %v215
        %v217 = vmul.f32 %v216, %v216
        %v218 = vsel %vm204, %v217, 0.0
        %219 = vadd.xlane.f32.xlu0 %v218
        %v220 = vpop.xlane.xlu0 %219
        %v221 = vrcp.pop 31.0
        %v222 = vmul.f32 31.0, %v221
        %v223 = vsub.f32 1.0, %v222
        %v224 = vmul.f32 %v221, %v223
        %v225 = vadd.f32 %v221, %v224
        %vm226 = vweird.f32 %v221
        %v227 = vsel %vm226, %v221, %v225
        %v228 = vmul.f32 %v220, %v227
        %v229 = vrsqrt.pop %v228
        %v230 = vmul.f32 %v229, %v228
        %v231 = vmul.f32 %v230, %v229
        %v232 = vmul.f32 0.5, %v231
        %v233 = vsub.f32 1.5, %v232
        %v234 = vmul.f32 %v229, %v233
        %v235 = vmul.f32 %v228, %v234
        %vm236 = vcmp.eq.f32.partialorder %v228, inf
        %v237 = vsel %vm236, %v228, %v235
        %vm238 = vcmp.eq.f32.partialorder %v228, 0.0
        %v239 = vand.u32 %v228, 2147483648
        %v240 = vsel %vm238, %v239, %v237
        %v241 = vadd.f32 %v240, 1e-06
        %v242 = vrcp.pop %v241
        %v243 = vmul.f32 %v241, %v242
        %v244 = vsub.f32 2.0, %v243
        %v245 = vmul.f32 %v242, %v244
        %v246 = vmul.f32 %v216, %v245
        %v247 = vld [vmem:[#allocation5] sm:$0x1]
        %v249 = vperm.slane %v247, 0
        %v251 = vmul.f32 %v246, %v249
        %v252 = vld [vmem:[%s2] sm:$0x1]
        %v254 = vperm.slane %v252, 0
        %v256 = vadd.f32 %v251, %v254
        %257 = vst.msk [vmem:[%s202] sm:$0xff] %vm204, %v256
        %s258 = sand.u32 %s97, 1
        %s259 = scalar_lea.sflag [#allocation4], %s258
        %s260 = sand.u32 %s97, 1
        %s261 = smul.addr %s260, 8
        %s262 = scalar_lea.vmem [#allocation7], %s261
        // Predicated region
        $region41: #{tpu_custom_call.1} parent=31 // pred_check
          %p263 = pneg %p107
        $region42: #{tpu_custom_call.1} parent=31 // pred_check_branch
          %265 = sbr.rel (%p263) target = $region44
        $region43: #{tpu_custom_call.1} parent=31 // pred_region
          %267 = vsyncadd %s259, 0
          %s268 = smul.addr %s21, 8
          %s269 = scalar_lea.hbm %s3, %s268
          %s271 = sshll.u32 %s262, 4
          %s272 = int_to_ptr.vmem [resolvable:$true] %s271
          %s273 = sshll.u32 %s269, 4
          %s274 = int_to_ptr.hbm [resolvable:$true] %s273
          %276 = dma.vmem_to_hbm [thread:$0]  %s272, 128, %s274, %s259
        $region44: #{tpu_custom_call.1} parent=31 // pred_fallthru
          _
      $region32: #{tpu_custom_call.1} parent=5 // pred_fallthru
        _
      %p277 = scmp.le.s32.totalorder 2, %s16
      // Predicated region
      $region45: #{tpu_custom_call.1} parent=5 // pred_check
        %p278 = pneg %p277
      $region46: #{tpu_custom_call.1} parent=5 // pred_check_branch
        %280 = sbr.rel (%p278) target = $region48
      $region47: #{tpu_custom_call.1} parent=5 // pred_region
        %s281 = ssub.s32 %s16, 2
        // Predicated region
        $region49: #{tpu_custom_call.1} parent=47 // pred_check
          %p282 = pneg %p113
        $region50: #{tpu_custom_call.1} parent=47 // pred_check_branch
          %284 = sbr.rel (%p282) target = $region52
        $region51: #{tpu_custom_call.1} parent=47 // pred_region
          %s285 = sand.u32 %s98, 1
          %s286 = scalar_lea.sflag [#allocation4], %s285
          %s287 = sand.u32 %s98, 1
          %s288 = smul.addr %s287, 8
          %s289 = scalar_lea.vmem [#allocation7], %s288
          %291 = dma.done %s286, 128
        $region52: #{tpu_custom_call.1} parent=47 // pred_fallthru
          _
      $region48: #{tpu_custom_call.1} parent=5 // pred_fallthru
        _
    $region6: #{tpu_custom_call.1} parent=1 // loop_footer
      %s20 = sadd.s32 1, %s16
    $region7: #{tpu_custom_call.1} parent=1 // loop_footer_branch
      %15 = sbr.rel target = $region3
    $region8: #{tpu_custom_call.1} parent=1 // loop_exit
      _
    %292 = vsyncpa [#allocation3], 1
    %s293 = scalar_lea.sflag [#allocation3], 1
    %294 = vsyncpa %s293, 1
    %295 = vsyncpa [#allocation6], 1
    %296 = vsyncpa [#allocation4], 1
    %s297 = scalar_lea.sflag [#allocation4], 1
    %298 = vsyncpa %s297, 1

</llo_original>
